<compile_context>
chip_gen: v5e
topology: v5e:2x2
jax: 0.10.0
libtpu: 0.0.40
codegen_flags: <defaults>
</compile_context>

<pallas_src>
import math
from functools import partial

import jax
import jax.numpy as jnp
from jax.experimental import pallas as pl
from jax.experimental.pallas import tpu as pltpu


def _round_up(x, m):
    return ((x + m - 1) // m) * m


def _scorer_kernel(q_ref, wt_ref, b_ref, v_ref, o_ref, *, scale):
    # x = tanh(q @ W^T + b)      (row_tile, hidden), f32 accumulation on MXU
    x = jnp.dot(q_ref[...], wt_ref[...], preferred_element_type=jnp.float32)
    x = jnp.tanh(x + b_ref[...])                       # b: (1, hidden) broadcast
    # score = sum(x * v, -1) * scale : VPU multiply + XLU lane reduce instead
    # of an N=1 MXU matmul (which would use <1% of MXU columns).
    s = jnp.sum(x * v_ref[...], axis=-1)               # (row_tile,)
    # Lane-dense store: one full (1, row_tile) row per grid step.
    o_ref[...] = (s * scale).reshape(1, -1).astype(o_ref.dtype)


def self_additive_scorer(query, keys, W, b, v, *, row_tile=512,
                         compute_dtype=None):
    """query: (bs, ..., target_len, d_q); keys: (bs, ..., source_len, d_k).

    Returns scores of shape query.shape[:-1], matching the torch forward:
        tanh(query @ W.T + b) @ v.T  squeezed, divided by sqrt(d_k).
    """
    *lead, d_q = query.shape
    hidden = W.shape[0]
    d_k = keys.shape[-1]
    scale = 1.0 / math.sqrt(d_k)

    rows = int(math.prod(lead)) if lead else 1

    # ---- tile selection ----------------------------------------------------
    # row_tile is also the output lane width -> keep it a multiple of 128.
    row_tile = max(128, _round_up(int(row_tile), 128))
    row_tile = min(row_tile, _round_up(rows, 128))     # don't over-pad tiny inputs

    itemsize = 2 if compute_dtype == jnp.bfloat16 else 4

    def vmem_est(rt):
        return (2 * rt * d_q * itemsize        # double-buffered q tile
                + d_q * hidden * itemsize      # resident W^T
                + 2 * hidden * 4               # b, v
                + rt * hidden * 4              # f32 tanh intermediate
                + 2 * rt * 4)                  # double-buffered output row

    VMEM_BUDGET = 24 * 1024 * 1024             # conservative: fits v5e/v6e/v7x
    while row_tile > 128 and vmem_est(row_tile) > VMEM_BUDGET:
        row_tile -= 128

    rows_padded = _round_up(rows, row_tile)
    num_tiles = rows_padded // row_tile

    # ---- operand layout ----------------------------------------------------
    q2d = query.reshape(rows, d_q)
    if rows_padded != rows:
        q2d = jnp.pad(q2d, ((0, rows_padded - rows), (0, 0)))
    w_t = W.T                                   # (d_q, hidden)
    if compute_dtype is not None:
        q2d = q2d.astype(compute_dtype)
        w_t = w_t.astype(compute_dtype)
    b2d = b.reshape(1, hidden).astype(jnp.float32)
    v2d = v.reshape(1, hidden).astype(jnp.float32)

    vmem_limit = int(min(64 * 1024 * 1024,
                         max(32 * 1024 * 1024, 4 * vmem_est(row_tile))))

    out = pl.pallas_call(
        partial(_scorer_kernel, scale=scale),
        out_shape=jax.ShapeDtypeStruct((num_tiles, row_tile), jnp.float32),
        grid_spec=pltpu.PrefetchScalarGridSpec(
            num_scalar_prefetch=0,
            grid=(num_tiles,),
            in_specs=[
                pl.BlockSpec((row_tile, d_q), lambda i: (i, 0)),  # streamed q
                pl.BlockSpec((d_q, hidden), lambda i: (0, 0)),    # resident W^T
                pl.BlockSpec((1, hidden), lambda i: (0, 0)),      # resident b
                pl.BlockSpec((1, hidden), lambda i: (0, 0)),      # resident v
            ],
            out_specs=pl.BlockSpec((1, row_tile), lambda i: (i, 0)),
        ),
        compiler_params=pltpu.CompilerParams(
            dimension_semantics=("parallel",),
            vmem_limit_bytes=vmem_limit),
    )(q2d, w_t, b2d, v2d)

    scores = out.reshape(rows_padded)[:rows]
    return scores.reshape(tuple(lead))


def init_params(key, vector_size, attn_hidden_size):
    """Deterministic re-implementation of the torch init:
    kaiming_uniform_(a=sqrt(5)) => U(-1/sqrt(fan_in), 1/sqrt(fan_in))."""
    kW, kb, kv = jax.random.split(key, 3)
    bound_W = 1.0 / math.sqrt(vector_size)
    W = jax.random.uniform(kW, (attn_hidden_size, vector_size),
                           jnp.float32, -bound_W, bound_W)
    bound_b = 1.0 / math.sqrt(vector_size)
    b = jax.random.uniform(kb, (attn_hidden_size,),
                           jnp.float32, -bound_b, bound_b)
    bound_v = 1.0 / math.sqrt(attn_hidden_size)
    v = jax.random.uniform(kv, (1, attn_hidden_size),
                           jnp.float32, -bound_v, bound_v)
    return W, b, v


def reference(query, keys, W, b, v):
    x = jnp.tanh(jnp.matmul(query, W.T) + b)
    score = jnp.matmul(x, v.T)[..., 0]
    return score / math.sqrt(keys.shape[-1])


if __name__ == "__main__":
    bs, tgt, src = 2, 8, 8
    vector_size, attn_hidden_size = 32, 32

    key = jax.random.PRNGKey(0)
    k_q, k_k, k_p = jax.random.split(key, 3)
    query = jax.random.normal(k_q, (bs, tgt, vector_size), jnp.float32)
    keys = jax.random.normal(k_k, (bs, src, vector_size), jnp.float32)
    W, b, v = init_params(k_p, vector_size, attn_hidden_size)

    out = self_additive_scorer(query, keys, W, b, v)
    out = jax.block_until_ready(out)

    ref = reference(query, keys, W, b, v)
    assert out.shape == (bs, tgt), out.shape
    assert jnp.allclose(out, ref, atol=1e-5, rtol=1e-5), (out, ref)
    print("KERNEL_OK")
</pallas_src>

<mosaic_0001>
module attributes {stable_mosaic.version = 11 : i64} {
  func.func @_scorer_kernel(%arg0: i32, %arg1: memref<128x32xf32, #tpu.memory_space<vmem>>, %arg2: memref<32x32xf32, #tpu.memory_space<vmem>>, %arg3: memref<1x32xf32, #tpu.memory_space<vmem>>, %arg4: memref<1x32xf32, #tpu.memory_space<vmem>>, %arg5: memref<1x128xf32, #tpu.memory_space<vmem>>) attributes {dimension_semantics = [#tpu.dimension_semantics<parallel>], iteration_bounds = array<i64: 1>, scalar_prefetch = 0 : i64, scratch_operands = 0 : i64, tpu.core_type = #tpu.core_type<tc>, window_params = [{transform_indices = @transform_0, window_bounds = array<i64: 128, 32>}, {pipeline_mode = #tpu.pipeline_mode<synchronous>, transform_indices = @transform_1, window_bounds = array<i64: 32, 32>}, {pipeline_mode = #tpu.pipeline_mode<synchronous>, transform_indices = @transform_2, window_bounds = array<i64: 1, 32>}, {pipeline_mode = #tpu.pipeline_mode<synchronous>, transform_indices = @transform_3, window_bounds = array<i64: 1, 32>}, {transform_indices = @transform_4, window_bounds = array<i64: 1, 128>}]} {
    %c0 = arith.constant 0 : index
    %c0_0 = arith.constant 0 : index
    %0 = vector.load %arg1[%c0, %c0_0] : memref<128x32xf32, #tpu.memory_space<vmem>>, vector<128x32xf32>
    %c0_1 = arith.constant 0 : index
    %c0_2 = arith.constant 0 : index
    %1 = vector.load %arg2[%c0_1, %c0_2] : memref<32x32xf32, #tpu.memory_space<vmem>>, vector<32x32xf32>
    %cst = arith.constant dense<0.000000e+00> : vector<128x32xf32>
    %2 = tpu.matmul %0, %1, %cst {dimension_numbers = #tpu.dot_dimension_numbers<[1], [0], [0], [1], [0, 0, 1, 1], [], []>} : vector<128x32xf32>, vector<32x32xf32>, vector<128x32xf32> -> vector<128x32xf32>
    %c0_3 = arith.constant 0 : index
    %c0_4 = arith.constant 0 : index
    %3 = vector.load %arg3[%c0_3, %c0_4] : memref<1x32xf32, #tpu.memory_space<vmem>>, vector<1x32xf32>
    %4 = vector.broadcast %3 : vector<1x32xf32> to vector<128x32xf32>
    %5 = arith.addf %2, %4 : vector<128x32xf32>
    %6 = math.tanh %5 : vector<128x32xf32>
    %c0_5 = arith.constant 0 : index
    %c0_6 = arith.constant 0 : index
    %7 = vector.load %arg4[%c0_5, %c0_6] : memref<1x32xf32, #tpu.memory_space<vmem>>, vector<1x32xf32>
    %8 = vector.broadcast %7 : vector<1x32xf32> to vector<128x32xf32>
    %9 = arith.mulf %6, %8 : vector<128x32xf32>
    %cst_7 = arith.constant dense<0.000000e+00> : vector<128xf32>
    %10 = vector.multi_reduction <add>, %9, %cst_7 [1] : vector<128x32xf32> to vector<128xf32>
    %cst_8 = arith.constant 0.176776692 : f32
    %11 = vector.broadcast %cst_8 : f32 to vector<128xf32>
    %12 = arith.mulf %10, %11 : vector<128xf32>
    %13 = vector.shape_cast %12 : vector<128xf32> to vector<1x128xf32>
    %c0_9 = arith.constant 0 : index
    %c0_10 = arith.constant 0 : index
    %14 = vector.load %arg5[%c0_9, %c0_10] : memref<1x128xf32, #tpu.memory_space<vmem>>, vector<1x128xf32>
    tpu.vector_store %arg5[%c0_9, %c0_10], %13 {strides = array<i32>} : memref<1x128xf32, #tpu.memory_space<vmem>>, vector<1x128xf32>,
    return
  }
  func.func @transform_0(%arg0: i32) -> (i32, i32) {
    %c0_i32 = arith.constant 0 : i32
    %c0_i32_0 = arith.constant 0 : i32
    return %arg0, %c0_i32 : i32, i32
  }
  func.func @transform_1(%arg0: i32) -> (i32, i32) {
    %c0_i32 = arith.constant 0 : i32
    %c0_i32_0 = arith.constant 0 : i32
    %c0_i32_1 = arith.constant 0 : i32
    return %c0_i32, %c0_i32_0 : i32, i32
  }
  func.func @transform_2(%arg0: i32) -> (i32, i32) {
    %c0_i32 = arith.constant 0 : i32
    %c0_i32_0 = arith.constant 0 : i32
    %c0_i32_1 = arith.constant 0 : i32
    return %c0_i32, %c0_i32_0 : i32, i32
  }
  func.func @transform_3(%arg0: i32) -> (i32, i32) {
    %c0_i32 = arith.constant 0 : i32
    %c0_i32_0 = arith.constant 0 : i32
    %c0_i32_1 = arith.constant 0 : i32
    return %c0_i32, %c0_i32_0 : i32, i32
  }
  func.func @transform_4(%arg0: i32) -> (i32, i32) {
    %c0_i32 = arith.constant 0 : i32
    %c0_i32_0 = arith.constant 0 : i32
    return %arg0, %c0_i32 : i32, i32
  }
}

</mosaic_0001>

<llo_original>
// kernel: tpu_custom_call.1
$region0: #{tpu_custom_call.1}
  #allocation0 [shape = 'u32[]', space=smem, size = 0x4, offset = 0x4, fixed_abs, tag = 'smem constant byte address 0x4 - core index']
  #allocation1 [shape = 'u32[72,128]{1,0:T(1,128)}', space=vmem, size = 0x9000, scoped, tag = 'internal scratch']
  %s0 = inlined_call_operand.vmem [shape: f32[128,32], index: 0, kind: input, shape index: {}]
  %s1 = inlined_call_operand.vmem [shape: f32[32,32], index: 1, kind: input, shape index: {}]
  %s2 = inlined_call_operand.vmem [shape: f32[1,32], index: 2, kind: input, shape index: {}]
  %s3 = inlined_call_operand.vmem [shape: f32[1,32], index: 3, kind: input, shape index: {}]
  %s4 = inlined_call_operand.hbm [shape: f32[1,128], index: 4, kind: output, shape index: {}]
  %s5 = sld [smem:[#allocation0]]
  $region26: #{tpu_custom_call.1} parent=0
    _
  %s7 = ssub.s32 1, %s5
  %s8 = scalar_select 0, %s7, %s5
  $region1: #{tpu_custom_call.1} parent=0
    #allocation2 [shape = 'u8[512]{0}', space=vmem, size = 0x400, scoped, tag = 'output window, operand 0, single buffered']
    #allocation3 [shape = 's32[1]{0}', space=sflag, size = 0x4, scoped, tag = 'scoped memory for tpu_custom_call.1']
    %9 = vsyncpa [#allocation3], 0
    // Predicated region
    $region2: #{tpu_custom_call.1} parent=1 // pred_check
      _
    $region3: #{tpu_custom_call.1} parent=1 // pred_check_branch
      %11 = sbr.rel (0) target = $region5
    $region4: #{tpu_custom_call.1} parent=1 // pred_region
      _
    $region5: #{tpu_custom_call.1} parent=1 // pred_fallthru
      _
    // Predicated region
    $region6: #{tpu_custom_call.1} parent=1 // pred_check
      _
    $region7: #{tpu_custom_call.1} parent=1 // pred_check_branch
      %13 = sbr.rel (0) target = $region9
    $region8: #{tpu_custom_call.1} parent=1 // pred_region
      _
    $region9: #{tpu_custom_call.1} parent=1 // pred_fallthru
      _
    // Predicated region
    $region10: #{tpu_custom_call.1} parent=1 // pred_check
      _
    $region11: #{tpu_custom_call.1} parent=1 // pred_check_branch
      %15 = sbr.rel (0) target = $region13
    $region12: #{tpu_custom_call.1} parent=1 // pred_region
      _
    $region13: #{tpu_custom_call.1} parent=1 // pred_fallthru
      _
    // Predicated region
    $region14: #{tpu_custom_call.1} parent=1 // pred_check
      _
    $region15: #{tpu_custom_call.1} parent=1 // pred_check_branch
      %17 = sbr.rel (0) target = $region17
    $region16: #{tpu_custom_call.1} parent=1 // pred_region
      _
    $region17: #{tpu_custom_call.1} parent=1 // pred_fallthru
      _
    %v18 = vld [vmem:[%s0] sm:$0xff]
    %v19 = vld [vmem:[%s0 + $0x8] sm:$0xff]
    %v20 = vld [vmem:[%s0 + $0x10] sm:$0xff]
    %v21 = vld [vmem:[%s0 + $0x18] sm:$0xff]
    %v22 = vld [vmem:[%s0 + $0x20] sm:$0xff]
    %v23 = vld [vmem:[%s0 + $0x28] sm:$0xff]
    %v24 = vld [vmem:[%s0 + $0x30] sm:$0xff]
    %v25 = vld [vmem:[%s0 + $0x38] sm:$0xff]
    %v26 = vld [vmem:[%s0 + $0x40] sm:$0xff]
    %v27 = vld [vmem:[%s0 + $0x48] sm:$0xff]
    %v28 = vld [vmem:[%s0 + $0x50] sm:$0xff]
    %v29 = vld [vmem:[%s0 + $0x58] sm:$0xff]
    %v30 = vld [vmem:[%s0 + $0x60] sm:$0xff]
    %v31 = vld [vmem:[%s0 + $0x68] sm:$0xff]
    %v32 = vld [vmem:[%s0 + $0x70] sm:$0xff]
    %v33 = vld [vmem:[%s0 + $0x78] sm:$0xff]
    %v34 = vld [vmem:[%s1] sm:$0xff]
    %v35 = vld [vmem:[%s1 + $0x8] sm:$0xff]
    %v36 = vld [vmem:[%s1 + $0x10] sm:$0xff]
    %v37 = vld [vmem:[%s1 + $0x18] sm:$0xff]
    %v38 = vld [vmem:[%s2] sm:$0x1]
    %v40 = vperm.slane %v38, 0
    %vm42 = vcmask 261120
    %v44 = vsel %vm42, %v18, 0
    %v47 = vsel %vm42, %v19, 0
    %v50 = vsel %vm42, %v20, 0
    %v53 = vsel %vm42, %v21, 0
    %v56 = vsel %vm42, %v22, 0
    %v59 = vsel %vm42, %v23, 0
    %v62 = vsel %vm42, %v24, 0
    %v65 = vsel %vm42, %v25, 0
    %v68 = vsel %vm42, %v26, 0
    %v71 = vsel %vm42, %v27, 0
    %v74 = vsel %vm42, %v28, 0
    %v77 = vsel %vm42, %v29, 0
    %v80 = vsel %vm42, %v30, 0
    %v83 = vsel %vm42, %v31, 0
    %v86 = vsel %vm42, %v32, 0
    %v89 = vsel %vm42, %v33, 0
    %91 = vmatpush.msra.mxu0 0.0
    %92 = vmatpush.msra.mxu0 0.0
    %93 = vmatpush.msra.mxu0 0.0
    %94 = vmatpush.msra.mxu0 0.0
    %95 = vmatpush.msra.mxu0 0.0
    %96 = vmatpush.msra.mxu0 0.0
    %97 = vmatpush.msra.mxu0 0.0
    %98 = vmatpush.msra.mxu0 0.0
    %99 = vmatpush.msra.mxu0 0.0
    %100 = vmatpush.msra.mxu0 0.0
    %101 = vmatpush.msra.mxu0 0.0
    %102 = vmatpush.msra.mxu0 0.0
    %103 = vmatpush.msra.mxu0 %v37
    %104 = vmatpush.msra.mxu0 %v36
    %105 = vmatpush.msra.mxu0 %v35
    %106 = vmatpush.msra.mxu0 %v34
    %107 = vmatmul.f32.gmra.mxu0 %v44
    %v108 = vpop.f32.mrf.mxu0
    %v109 = vadd.f32 %v40, %v108
    %110 = vmatmul.f32.gmra.mxu0 %v47
    %v111 = vpop.f32.mrf.mxu0
    %v112 = vadd.f32 %v40, %v111
    %113 = vmatmul.f32.gmra.mxu0 %v50
    %v114 = vpop.f32.mrf.mxu0
    %v115 = vadd.f32 %v40, %v114
    %116 = vmatmul.f32.gmra.mxu0 %v53
    %v117 = vpop.f32.mrf.mxu0
    %v118 = vadd.f32 %v40, %v117
    %119 = vmatmul.f32.gmra.mxu0 %v56
    %v120 = vpop.f32.mrf.mxu0
    %v121 = vadd.f32 %v40, %v120
    %122 = vmatmul.f32.gmra.mxu0 %v59
    %v123 = vpop.f32.mrf.mxu0
    %v124 = vadd.f32 %v40, %v123
    %125 = vmatmul.f32.gmra.mxu0 %v62
    %v126 = vpop.f32.mrf.mxu0
    %v127 = vadd.f32 %v40, %v126
    %128 = vmatmul.f32.gmra.mxu0 %v65
    %v129 = vpop.f32.mrf.mxu0
    %v130 = vadd.f32 %v40, %v129
    %131 = vmatmul.f32.gmra.mxu0 %v68
    %v132 = vpop.f32.mrf.mxu0
    %v133 = vadd.f32 %v40, %v132
    %134 = vmatmul.f32.gmra.mxu0 %v71
    %v135 = vpop.f32.mrf.mxu0
    %v136 = vadd.f32 %v40, %v135
    %137 = vmatmul.f32.gmra.mxu0 %v74
    %v138 = vpop.f32.mrf.mxu0
    %v139 = vadd.f32 %v40, %v138
    %140 = vmatmul.f32.gmra.mxu0 %v77
    %v141 = vpop.f32.mrf.mxu0
    %v142 = vadd.f32 %v40, %v141
    %143 = vmatmul.f32.gmra.mxu0 %v80
    %v144 = vpop.f32.mrf.mxu0
    %v145 = vadd.f32 %v40, %v144
    %146 = vmatmul.f32.gmra.mxu0 %v83
    %v147 = vpop.f32.mrf.mxu0
    %v148 = vadd.f32 %v40, %v147
    %149 = vmatmul.f32.gmra.mxu0 %v86
    %v150 = vpop.f32.mrf.mxu0
    %v151 = vadd.f32 %v40, %v150
    %152 = vmatmul.f32.gmra.mxu0 %v89
    %v153 = vpop.f32.mrf.mxu0
    %v154 = vadd.f32 %v40, %v153
    %155 = vdwg.mxu0
    %v156 = vtanh.pop %v109
    %v157 = vtanh.pop %v112
    %v158 = vtanh.pop %v115
    %v159 = vtanh.pop %v118
    %v160 = vtanh.pop %v121
    %v161 = vtanh.pop %v124
    %v162 = vtanh.pop %v127
    %v163 = vtanh.pop %v130
    %v164 = vtanh.pop %v133
    %v165 = vtanh.pop %v136
    %v166 = vtanh.pop %v139
    %v167 = vtanh.pop %v142
    %v168 = vtanh.pop %v145
    %v169 = vtanh.pop %v148
    %v170 = vtanh.pop %v151
    %v171 = vtanh.pop %v154
    %v172 = vld [vmem:[%s3] sm:$0x1]
    %v174 = vperm.slane %v172, 0
    %v176 = vmul.f32 %v156, %v174
    %v177 = vmul.f32 %v157, %v174
    %v178 = vmul.f32 %v158, %v174
    %v179 = vmul.f32 %v159, %v174
    %v180 = vmul.f32 %v160, %v174
    %v181 = vmul.f32 %v161, %v174
    %v182 = vmul.f32 %v162, %v174
    %v183 = vmul.f32 %v163, %v174
    %v184 = vmul.f32 %v164, %v174
    %v185 = vmul.f32 %v165, %v174
    %v186 = vmul.f32 %v166, %v174
    %v187 = vmul.f32 %v167, %v174
    %v188 = vmul.f32 %v168, %v174
    %v189 = vmul.f32 %v169, %v174
    %v190 = vmul.f32 %v170, %v174
    %v191 = vmul.f32 %v171, %v174
    %v192 = vsel %vm42, %v176, 0.0
    %193 = vadd.xlane.f32.xlu0 %v192
    %v194 = vpop.xlane.xlu0 %193
    %v195 = vsel %vm42, %v177, 0.0
    %196 = vadd.xlane.f32.xlu0 %v195
    %v197 = vpop.xlane.xlu0 %196
    %v198 = vsel %vm42, %v178, 0.0
    %199 = vadd.xlane.f32.xlu0 %v198
    %v200 = vpop.xlane.xlu0 %199
    %v201 = vsel %vm42, %v179, 0.0
    %202 = vadd.xlane.f32.xlu0 %v201
    %v203 = vpop.xlane.xlu0 %202
    %v204 = vsel %vm42, %v180, 0.0
    %205 = vadd.xlane.f32.xlu0 %v204
    %v206 = vpop.xlane.xlu0 %205
    %v207 = vsel %vm42, %v181, 0.0
    %208 = vadd.xlane.f32.xlu0 %v207
    %v209 = vpop.xlane.xlu0 %208
    %v210 = vsel %vm42, %v182, 0.0
    %211 = vadd.xlane.f32.xlu0 %v210
    %v212 = vpop.xlane.xlu0 %211
    %v213 = vsel %vm42, %v183, 0.0
    %214 = vadd.xlane.f32.xlu0 %v213
    %v215 = vpop.xlane.xlu0 %214
    %v216 = vsel %vm42, %v184, 0.0
    %217 = vadd.xlane.f32.xlu0 %v216
    %v218 = vpop.xlane.xlu0 %217
    %v219 = vsel %vm42, %v185, 0.0
    %220 = vadd.xlane.f32.xlu0 %v219
    %v221 = vpop.xlane.xlu0 %220
    %v222 = vsel %vm42, %v186, 0.0
    %223 = vadd.xlane.f32.xlu0 %v222
    %v224 = vpop.xlane.xlu0 %223
    %v225 = vsel %vm42, %v187, 0.0
    %226 = vadd.xlane.f32.xlu0 %v225
    %v227 = vpop.xlane.xlu0 %226
    %v228 = vsel %vm42, %v188, 0.0
    %229 = vadd.xlane.f32.xlu0 %v228
    %v230 = vpop.xlane.xlu0 %229
    %v231 = vsel %vm42, %v189, 0.0
    %232 = vadd.xlane.f32.xlu0 %v231
    %v233 = vpop.xlane.xlu0 %232
    %v234 = vsel %vm42, %v190, 0.0
    %235 = vadd.xlane.f32.xlu0 %v234
    %v236 = vpop.xlane.xlu0 %235
    %v237 = vsel %vm42, %v191, 0.0
    %238 = vadd.xlane.f32.xlu0 %v237
    %v239 = vpop.xlane.xlu0 %238
    %v240 = vmul.f32 %v194, 0.17677669
    %v241 = vmul.f32 %v197, 0.17677669
    %v242 = vmul.f32 %v200, 0.17677669
    %v243 = vmul.f32 %v203, 0.17677669
    %v244 = vmul.f32 %v206, 0.17677669
    %v245 = vmul.f32 %v209, 0.17677669
    %v246 = vmul.f32 %v212, 0.17677669
    %v247 = vmul.f32 %v215, 0.17677669
    %v248 = vmul.f32 %v218, 0.17677669
    %v249 = vmul.f32 %v221, 0.17677669
    %v250 = vmul.f32 %v224, 0.17677669
    %v251 = vmul.f32 %v227, 0.17677669
    %v252 = vmul.f32 %v230, 0.17677669
    %v253 = vmul.f32 %v233, 0.17677669
    %v254 = vmul.f32 %v236, 0.17677669
    %v255 = vmul.f32 %v239, 0.17677669
    %v272 = vlaneseq
    %v273 = vand.u32 %v272, 127
    %v274 = vperm.slane %v240, %v273
    %v275 = vadd.s32 %v273, 4294967288
    %v276 = vperm.slane %v241, %v275
    %vm277 = vcmask 130112
    %v278 = vsel %vm277, %v276, %v274
    %v279 = vadd.s32 %v273, 4294967280
    %v280 = vperm.slane %v242, %v279
    %vm281 = vcmask 195712
    %v282 = vsel %vm281, %v280, %v278
    %v283 = vadd.s32 %v273, 4294967272
    %v284 = vperm.slane %v243, %v283
    %vm285 = vcmask 261312
    %v286 = vsel %vm285, %v284, %v282
    %v287 = vadd.s32 %v273, 4294967264
    %v288 = vperm.slane %v244, %v287
    %vm289 = vcmask 326912
    %v290 = vsel %vm289, %v288, %v286
    %v291 = vadd.s32 %v273, 4294967256
    %v292 = vperm.slane %v245, %v291
    %vm293 = vcmask 392512
    %v294 = vsel %vm293, %v292, %v290
    %v295 = vadd.s32 %v273, 4294967248
    %v296 = vperm.slane %v246, %v295
    %vm297 = vcmask 458112
    %v298 = vsel %vm297, %v296, %v294
    %v299 = vadd.s32 %v273, 4294967240
    %v300 = vperm.slane %v247, %v299
    %vm301 = vcmask 523712
    %v302 = vsel %vm301, %v300, %v298
    %v303 = vadd.s32 %v273, 4294967232
    %v304 = vperm.slane %v248, %v303
    %vm305 = vcmask 589312
    %v306 = vsel %vm305, %v304, %v302
    %v307 = vadd.s32 %v273, 4294967224
    %v308 = vperm.slane %v249, %v307
    %vm309 = vcmask 654912
    %v310 = vsel %vm309, %v308, %v306
    %v311 = vadd.s32 %v273, 4294967216
    %v312 = vperm.slane %v250, %v311
    %vm313 = vcmask 720512
    %v314 = vsel %vm313, %v312, %v310
    %v315 = vadd.s32 %v273, 4294967208
    %v316 = vperm.slane %v251, %v315
    %vm317 = vcmask 786112
    %v318 = vsel %vm317, %v316, %v314
    %v319 = vadd.s32 %v273, 4294967200
    %v320 = vperm.slane %v252, %v319
    %vm321 = vcmask 851712
    %v322 = vsel %vm321, %v320, %v318
    %v323 = vadd.s32 %v273, 4294967192
    %v324 = vperm.slane %v253, %v323
    %vm325 = vcmask 917312
    %v326 = vsel %vm325, %v324, %v322
    %v327 = vadd.s32 %v273, 4294967184
    %v328 = vperm.slane %v254, %v327
    %vm329 = vcmask 982912
    %v330 = vsel %vm329, %v328, %v326
    %v331 = vadd.s32 %v273, 4294967176
    %v332 = vperm.slane %v255, %v331
    %vm333 = vcmask 1048512
    %v334 = vsel %vm333, %v332, %v330
    %336 = vst [vmem:[#allocation2] sm:$0x1] %v334
    // Predicated region
    $region18: #{tpu_custom_call.1} parent=1 // pred_check
      _
    $region19: #{tpu_custom_call.1} parent=1 // pred_check_branch
      %338 = sbr.rel (0) target = $region21
    $region20: #{tpu_custom_call.1} parent=1 // pred_region
      %340 = vsyncadd [#allocation3], 0
      %s342 = sshll.u32 [#allocation2], 4
      %s343 = int_to_ptr.vmem [resolvable:$true] %s342
      %s344 = sshll.u32 %s4, 4
      %s345 = int_to_ptr.hbm [resolvable:$true] %s344
      %347 = dma.vmem_to_hbm [thread:$0]  %s343, 16, %s345, [#allocation3]
    $region21: #{tpu_custom_call.1} parent=1 // pred_fallthru
      _
    // Predicated region
    $region22: #{tpu_custom_call.1} parent=1 // pred_check
      _
    $region23: #{tpu_custom_call.1} parent=1 // pred_check_branch
      %349 = sbr.rel (0) target = $region25
    $region24: #{tpu_custom_call.1} parent=1 // pred_region
      %351 = dma.done [#allocation3], 16
    $region25: #{tpu_custom_call.1} parent=1 // pred_fallthru
      _
    %352 = vsyncpa [#allocation3], 1

</llo_original>
